<compile_context>
chip_gen: v5e
topology: v5e:2x2
jax: 0.10.0
libtpu: 0.0.40
codegen_flags: <defaults>
</compile_context>

<pallas_src>
import math

import jax
import jax.numpy as jnp
from jax.experimental import pallas as pl
from jax.experimental.pallas import tpu as pltpu

# ----------------------------- model config ---------------------------------
IN_FEATURES = 16
OUT_FEATURES = 2          # `output` in the PyTorch module (also Softplus beta)
BATCH = 8
BN_EPS = 1e-5
SOFTPLUS_BETA = float(OUT_FEATURES)
SOFTPLUS_THRESHOLD = 20.0

LAYER_DIMS = [
    (IN_FEATURES, 128),   # linear1
    (128, 64),            # linear2
    (64, 32),             # linear3
    (32, 16),             # linear4
    (16, 8),              # linear5
    (8, OUT_FEATURES),    # linear6
    (8, OUT_FEATURES),    # linear7
]

# -------------------------- packed-parameter layout --------------------------
# Weight slab: each (in, out) weight is zero-padded to 128 lanes and stacked
# along the row (sublane) axis. linear6/linear7 are fused into one (8, 4).
_W_SHAPES = [
    (IN_FEATURES, 128),        # w1
    (128, 64),                 # w2
    (64, 32),                  # w3
    (32, 16),                  # w4
    (16, 8),                   # w5
    (8, 2 * OUT_FEATURES),     # w6 | w7 fused head
]
_W_OFFS = []
_off = 0
for _r, _ in _W_SHAPES:
    _W_OFFS.append(_off)
    _off += _r
W_SLAB_ROWS = _off             # = 264, multiple of 8 (sublane-aligned slices)
W_SLAB_COLS = 128

# Bias slab: one row per vector, padded to 128 lanes.
# Row order: b1, b2, b3, g1, be1, b4, b5, g2, be2, b67
_B_WIDTHS = [128, 64, 32, 32, 32, 16, 8, 8, 8, 2 * OUT_FEATURES]
B_SLAB_ROWS = len(_B_WIDTHS)   # 10
B_SLAB_COLS = 128


# ------------------------------- kernel -------------------------------------
def _softplus_beta(x, beta, threshold):
    bx = beta * x
    # clamp the exp argument so the unused branch never overflows
    safe = jnp.log1p(jnp.exp(jnp.minimum(bx, threshold))) / beta
    return jnp.where(bx > threshold, x, safe)


def _batchnorm_train_onepass(x, gamma, beta, eps):
    # Single-pass batch statistics: E[x], E[x^2]; biased variance (PyTorch
    # training-mode normalization uses biased var).
    mean = jnp.mean(x, axis=0, keepdims=True)
    mean_sq = jnp.mean(x * x, axis=0, keepdims=True)
    var = jnp.maximum(mean_sq - mean * mean, 0.0)
    return (x - mean) * jax.lax.rsqrt(var + eps) * gamma + beta


def deepweisurv_kernel(x_ref, w_ref, b_ref, out_ref):
    x = x_ref[...]                       # (B, 16)

    def wslice(idx):
        off = _W_OFFS[idx]
        rows, cols = _W_SHAPES[idx]
        # Row offsets are all multiples of 8 -> sublane-aligned static slices.
        return w_ref[off:off + rows, 0:cols]

    # Bias/BN slab is tiny (10x128 f32): load once, slice the value in-register.
    bias_all = b_ref[...]

    def bslice(idx):
        return bias_all[idx:idx + 1, 0:_B_WIDTHS[idx]]

    b1, b2, b3 = bslice(0), bslice(1), bslice(2)
    g1, be1 = bslice(3), bslice(4)
    b4, b5 = bslice(5), bslice(6)
    g2, be2 = bslice(7), bslice(8)
    b67 = bslice(9)

    def lin_relu(h, w, b):
        y = jnp.dot(h, w, preferred_element_type=jnp.float32) + b
        return jnp.maximum(y, 0.0)

    h = lin_relu(x, wslice(0), b1)                         # (B, 128)
    h = lin_relu(h, wslice(1), b2)                         # (B, 64)
    h = lin_relu(h, wslice(2), b3)                         # (B, 32)
    h = _batchnorm_train_onepass(h, g1, be1, BN_EPS)       # bn1
    h = lin_relu(h, wslice(3), b4)                         # (B, 16)
    h = lin_relu(h, wslice(4), b5)                         # (B, 8)
    h = _batchnorm_train_onepass(h, g2, be2, BN_EPS)       # bn2

    # Fused head: [linear6 | linear7] -> (B, 4), one dot + one softplus.
    head = jnp.dot(h, wslice(5), preferred_element_type=jnp.float32) + b67
    out_ref[...] = _softplus_beta(head, SOFTPLUS_BETA, SOFTPLUS_THRESHOLD)


# ------------------------------- wrapper -------------------------------------
def pack_params(params):
    """Pack the 18 raw parameter arrays into two VMEM slabs."""
    (w1, b1, w2, b2, w3, b3, g1, be1,
     w4, b4, w5, b5, g2, be2, w6, b6, w7, b7) = params

    def pad_cols(w, width=W_SLAB_COLS):
        return jnp.pad(w, ((0, 0), (0, width - w.shape[1])))

    w67 = jnp.concatenate([w6, w7], axis=1)                # (8, 4)
    w_slab = jnp.concatenate(
        [pad_cols(w1), pad_cols(w2), pad_cols(w3),
         pad_cols(w4), pad_cols(w5), pad_cols(w67)], axis=0)   # (264, 128)

    def pad_row(v, width=B_SLAB_COLS):
        v = v.reshape(1, -1)
        return jnp.pad(v, ((0, 0), (0, width - v.shape[1])))

    b67 = jnp.concatenate([b6.reshape(1, -1), b7.reshape(1, -1)], axis=1)
    b_slab = jnp.concatenate(
        [pad_row(b1), pad_row(b2), pad_row(b3), pad_row(g1), pad_row(be1),
         pad_row(b4), pad_row(b5), pad_row(g2), pad_row(be2), pad_row(b67)],
        axis=0)                                            # (10, 128)

    return w_slab.astype(jnp.float32), b_slab.astype(jnp.float32)


def deepweisurv_forward(x, w_slab, b_slab):
    batch = x.shape[0]
    vmem = pl.BlockSpec(memory_space=pltpu.MemorySpace.VMEM)
    out = pl.pallas_call(
        deepweisurv_kernel,
        out_shape=jax.ShapeDtypeStruct((batch, 2 * OUT_FEATURES), jnp.float32),
        in_specs=[vmem, vmem, vmem],
        out_specs=vmem,
    )(x, w_slab, b_slab)
    beta = out[:, :OUT_FEATURES]
    eta = out[:, OUT_FEATURES:]
    return beta, eta


# ------------------------- deterministic param init --------------------------
def init_params(key):
    """PyTorch-style nn.Linear init: U(-1/sqrt(fan_in), +1/sqrt(fan_in)).
    Weights as (in, out) so forward computes x @ W + b. BatchNorm: gamma=1,
    beta=0 (default init)."""
    keys = jax.random.split(key, 2 * len(LAYER_DIMS))
    linears = []
    for i, (fan_in, fan_out) in enumerate(LAYER_DIMS):
        bound = 1.0 / math.sqrt(fan_in)
        w = jax.random.uniform(keys[2 * i], (fan_in, fan_out), jnp.float32,
                               minval=-bound, maxval=bound)
        b = jax.random.uniform(keys[2 * i + 1], (1, fan_out), jnp.float32,
                               minval=-bound, maxval=bound)
        linears.append((w, b))

    (w1, b1), (w2, b2), (w3, b3), (w4, b4), (w5, b5), (w6, b6), (w7, b7) = linears
    g1 = jnp.ones((1, 32), jnp.float32)
    be1 = jnp.zeros((1, 32), jnp.float32)
    g2 = jnp.ones((1, 8), jnp.float32)
    be2 = jnp.zeros((1, 8), jnp.float32)

    return (w1, b1, w2, b2, w3, b3,
            g1, be1,
            w4, b4, w5, b5,
            g2, be2,
            w6, b6, w7, b7)


# ------------------------------ pure-JAX reference ---------------------------
def _batchnorm_train_ref(x, gamma, beta, eps):
    mean = jnp.mean(x, axis=0, keepdims=True)
    var = jnp.mean((x - mean) ** 2, axis=0, keepdims=True)   # biased variance
    return (x - mean) * jax.lax.rsqrt(var + eps) * gamma + beta


def reference_forward(x, params):
    (w1, b1, w2, b2, w3, b3, g1, be1,
     w4, b4, w5, b5, g2, be2, w6, b6, w7, b7) = params

    def lin_relu(h, w, b):
        return jnp.maximum(h @ w + b, 0.0)

    h = lin_relu(x, w1, b1)
    h = lin_relu(h, w2, b2)
    h = lin_relu(h, w3, b3)
    h = _batchnorm_train_ref(h, g1, be1, BN_EPS)
    h = lin_relu(h, w4, b4)
    h = lin_relu(h, w5, b5)
    h = _batchnorm_train_ref(h, g2, be2, BN_EPS)
    beta = _softplus_beta(h @ w6 + b6, SOFTPLUS_BETA, SOFTPLUS_THRESHOLD)
    eta = _softplus_beta(h @ w7 + b7, SOFTPLUS_BETA, SOFTPLUS_THRESHOLD)
    return beta, eta


# --------------------------------- main --------------------------------------
if __name__ == "__main__":
    key = jax.random.PRNGKey(0)
    k_x, k_p = jax.random.split(key)

    x = jax.random.normal(k_x, (BATCH, IN_FEATURES), jnp.float32)
    params = init_params(k_p)
    w_slab, b_slab = pack_params(params)

    beta, eta = deepweisurv_forward(x, w_slab, b_slab)
    jax.block_until_ready((beta, eta))

    beta_ref, eta_ref = reference_forward(x, params)
    assert beta.shape == (BATCH, OUT_FEATURES) and eta.shape == (BATCH, OUT_FEATURES)
    assert jnp.allclose(beta, beta_ref, atol=1e-4, rtol=1e-4)
    assert jnp.allclose(eta, eta_ref, atol=1e-4, rtol=1e-4)

    print("KERNEL_OK")
</pallas_src>

<mosaic_0001>
module attributes {stable_mosaic.version = 11 : i64} {
  func.func @deepweisurv_kernel(%arg0: memref<8x16xf32, #tpu.memory_space<vmem>>, %arg1: memref<264x128xf32, #tpu.memory_space<vmem>>, %arg2: memref<10x128xf32, #tpu.memory_space<vmem>>, %arg3: memref<8x4xf32, #tpu.memory_space<vmem>>) attributes {dimension_semantics = [], scalar_prefetch = 0 : i64, scratch_operands = 0 : i64, tpu.core_type = #tpu.core_type<tc>} {
    %c0 = arith.constant 0 : index
    %c0_0 = arith.constant 0 : index
    %0 = vector.load %arg0[%c0, %c0_0] : memref<8x16xf32, #tpu.memory_space<vmem>>, vector<8x16xf32>
    %c0_1 = arith.constant 0 : index
    %c0_2 = arith.constant 0 : index
    %1 = vector.load %arg2[%c0_1, %c0_2] : memref<10x128xf32, #tpu.memory_space<vmem>>, vector<10x128xf32>
    %2 = vector.extract_strided_slice %1 {offsets = [0, 0], sizes = [1, 128], strides = [1, 1]} : vector<10x128xf32> to vector<1x128xf32>
    %3 = vector.extract_strided_slice %1 {offsets = [1, 0], sizes = [1, 64], strides = [1, 1]} : vector<10x128xf32> to vector<1x64xf32>
    %4 = vector.extract_strided_slice %1 {offsets = [2, 0], sizes = [1, 32], strides = [1, 1]} : vector<10x128xf32> to vector<1x32xf32>
    %5 = vector.extract_strided_slice %1 {offsets = [3, 0], sizes = [1, 32], strides = [1, 1]} : vector<10x128xf32> to vector<1x32xf32>
    %6 = vector.extract_strided_slice %1 {offsets = [4, 0], sizes = [1, 32], strides = [1, 1]} : vector<10x128xf32> to vector<1x32xf32>
    %7 = vector.extract_strided_slice %1 {offsets = [5, 0], sizes = [1, 16], strides = [1, 1]} : vector<10x128xf32> to vector<1x16xf32>
    %8 = vector.extract_strided_slice %1 {offsets = [6, 0], sizes = [1, 8], strides = [1, 1]} : vector<10x128xf32> to vector<1x8xf32>
    %9 = vector.extract_strided_slice %1 {offsets = [7, 0], sizes = [1, 8], strides = [1, 1]} : vector<10x128xf32> to vector<1x8xf32>
    %10 = vector.extract_strided_slice %1 {offsets = [8, 0], sizes = [1, 8], strides = [1, 1]} : vector<10x128xf32> to vector<1x8xf32>
    %11 = vector.extract_strided_slice %1 {offsets = [9, 0], sizes = [1, 4], strides = [1, 1]} : vector<10x128xf32> to vector<1x4xf32>
    %c0_3 = arith.constant 0 : index
    %c0_4 = arith.constant 0 : index
    %12 = vector.load %arg1[%c0_3, %c0_4] : memref<264x128xf32, #tpu.memory_space<vmem>>, vector<16x128xf32>
    %cst = arith.constant dense<0.000000e+00> : vector<8x128xf32>
    %13 = tpu.matmul %0, %12, %cst {dimension_numbers = #tpu.dot_dimension_numbers<[1], [0], [0], [1], [0, 0, 1, 1], [], []>} : vector<8x16xf32>, vector<16x128xf32>, vector<8x128xf32> -> vector<8x128xf32>
    %14 = vector.broadcast %2 : vector<1x128xf32> to vector<8x128xf32>
    %15 = arith.addf %13, %14 : vector<8x128xf32>
    %cst_5 = arith.constant 0.000000e+00 : f32
    %16 = vector.broadcast %cst_5 : f32 to vector<8x128xf32>
    %17 = arith.maximumf %15, %16 : vector<8x128xf32>
    %c16 = arith.constant 16 : index
    %c0_6 = arith.constant 0 : index
    %18 = vector.load %arg1[%c16, %c0_6] : memref<264x128xf32, #tpu.memory_space<vmem>>, vector<128x64xf32>
    %cst_7 = arith.constant dense<0.000000e+00> : vector<8x64xf32>
    %19 = tpu.matmul %17, %18, %cst_7 {dimension_numbers = #tpu.dot_dimension_numbers<[1], [0], [0], [1], [0, 0, 1, 1], [], []>} : vector<8x128xf32>, vector<128x64xf32>, vector<8x64xf32> -> vector<8x64xf32>
    %20 = vector.broadcast %3 : vector<1x64xf32> to vector<8x64xf32>
    %21 = arith.addf %19, %20 : vector<8x64xf32>
    %cst_8 = arith.constant 0.000000e+00 : f32
    %22 = vector.broadcast %cst_8 : f32 to vector<8x64xf32>
    %23 = arith.maximumf %21, %22 : vector<8x64xf32>
    %c144 = arith.constant 144 : index
    %c0_9 = arith.constant 0 : index
    %24 = vector.load %arg1[%c144, %c0_9] : memref<264x128xf32, #tpu.memory_space<vmem>>, vector<64x32xf32>
    %cst_10 = arith.constant dense<0.000000e+00> : vector<8x32xf32>
    %25 = tpu.matmul %23, %24, %cst_10 {dimension_numbers = #tpu.dot_dimension_numbers<[1], [0], [0], [1], [0, 0, 1, 1], [], []>} : vector<8x64xf32>, vector<64x32xf32>, vector<8x32xf32> -> vector<8x32xf32>
    %26 = vector.broadcast %4 : vector<1x32xf32> to vector<8x32xf32>
    %27 = arith.addf %25, %26 : vector<8x32xf32>
    %cst_11 = arith.constant 0.000000e+00 : f32
    %28 = vector.broadcast %cst_11 : f32 to vector<8x32xf32>
    %29 = arith.maximumf %27, %28 : vector<8x32xf32>
    %cst_12 = arith.constant dense<0.000000e+00> : vector<32xf32>
    %30 = vector.multi_reduction <add>, %29, %cst_12 [0] : vector<8x32xf32> to vector<32xf32>
    %31 = vector.shape_cast %30 : vector<32xf32> to vector<1x32xf32>
    %cst_13 = arith.constant 8.000000e+00 : f32
    %32 = vector.broadcast %cst_13 : f32 to vector<1x32xf32>
    %33 = arith.divf %31, %32 : vector<1x32xf32>
    %34 = arith.mulf %29, %29 : vector<8x32xf32>
    %cst_14 = arith.constant dense<0.000000e+00> : vector<32xf32>
    %35 = vector.multi_reduction <add>, %34, %cst_14 [0] : vector<8x32xf32> to vector<32xf32>
    %36 = vector.shape_cast %35 : vector<32xf32> to vector<1x32xf32>
    %cst_15 = arith.constant 8.000000e+00 : f32
    %37 = vector.broadcast %cst_15 : f32 to vector<1x32xf32>
    %38 = arith.divf %36, %37 : vector<1x32xf32>
    %39 = arith.mulf %33, %33 : vector<1x32xf32>
    %40 = arith.subf %38, %39 : vector<1x32xf32>
    %cst_16 = arith.constant 0.000000e+00 : f32
    %41 = vector.broadcast %cst_16 : f32 to vector<1x32xf32>
    %42 = arith.maximumf %40, %41 : vector<1x32xf32>
    %43 = vector.broadcast %33 : vector<1x32xf32> to vector<8x32xf32>
    %44 = arith.subf %29, %43 : vector<8x32xf32>
    %cst_17 = arith.constant 9.99999974E-6 : f32
    %45 = vector.broadcast %cst_17 : f32 to vector<1x32xf32>
    %46 = arith.addf %42, %45 : vector<1x32xf32>
    %47 = math.rsqrt %46 : vector<1x32xf32>
    %48 = vector.broadcast %47 : vector<1x32xf32> to vector<8x32xf32>
    %49 = arith.mulf %44, %48 : vector<8x32xf32>
    %50 = vector.broadcast %5 : vector<1x32xf32> to vector<8x32xf32>
    %51 = arith.mulf %49, %50 : vector<8x32xf32>
    %52 = vector.broadcast %6 : vector<1x32xf32> to vector<8x32xf32>
    %53 = arith.addf %51, %52 : vector<8x32xf32>
    %c208 = arith.constant 208 : index
    %c0_18 = arith.constant 0 : index
    %54 = vector.load %arg1[%c208, %c0_18] : memref<264x128xf32, #tpu.memory_space<vmem>>, vector<32x16xf32>
    %cst_19 = arith.constant dense<0.000000e+00> : vector<8x16xf32>
    %55 = tpu.matmul %53, %54, %cst_19 {dimension_numbers = #tpu.dot_dimension_numbers<[1], [0], [0], [1], [0, 0, 1, 1], [], []>} : vector<8x32xf32>, vector<32x16xf32>, vector<8x16xf32> -> vector<8x16xf32>
    %56 = vector.broadcast %7 : vector<1x16xf32> to vector<8x16xf32>
    %57 = arith.addf %55, %56 : vector<8x16xf32>
    %cst_20 = arith.constant 0.000000e+00 : f32
    %58 = vector.broadcast %cst_20 : f32 to vector<8x16xf32>
    %59 = arith.maximumf %57, %58 : vector<8x16xf32>
    %c240 = arith.constant 240 : index
    %c0_21 = arith.constant 0 : index
    %60 = vector.load %arg1[%c240, %c0_21] : memref<264x128xf32, #tpu.memory_space<vmem>>, vector<16x8xf32>
    %cst_22 = arith.constant dense<0.000000e+00> : vector<8x8xf32>
    %61 = tpu.matmul %59, %60, %cst_22 {dimension_numbers = #tpu.dot_dimension_numbers<[1], [0], [0], [1], [0, 0, 1, 1], [], []>} : vector<8x16xf32>, vector<16x8xf32>, vector<8x8xf32> -> vector<8x8xf32>
    %62 = vector.broadcast %8 : vector<1x8xf32> to vector<8x8xf32>
    %63 = arith.addf %61, %62 : vector<8x8xf32>
    %cst_23 = arith.constant 0.000000e+00 : f32
    %64 = vector.broadcast %cst_23 : f32 to vector<8x8xf32>
    %65 = arith.maximumf %63, %64 : vector<8x8xf32>
    %cst_24 = arith.constant dense<0.000000e+00> : vector<8xf32>
    %66 = vector.multi_reduction <add>, %65, %cst_24 [0] : vector<8x8xf32> to vector<8xf32>
    %67 = vector.shape_cast %66 : vector<8xf32> to vector<1x8xf32>
    %cst_25 = arith.constant 8.000000e+00 : f32
    %68 = vector.broadcast %cst_25 : f32 to vector<1x8xf32>
    %69 = arith.divf %67, %68 : vector<1x8xf32>
    %70 = arith.mulf %65, %65 : vector<8x8xf32>
    %cst_26 = arith.constant dense<0.000000e+00> : vector<8xf32>
    %71 = vector.multi_reduction <add>, %70, %cst_26 [0] : vector<8x8xf32> to vector<8xf32>
    %72 = vector.shape_cast %71 : vector<8xf32> to vector<1x8xf32>
    %cst_27 = arith.constant 8.000000e+00 : f32
    %73 = vector.broadcast %cst_27 : f32 to vector<1x8xf32>
    %74 = arith.divf %72, %73 : vector<1x8xf32>
    %75 = arith.mulf %69, %69 : vector<1x8xf32>
    %76 = arith.subf %74, %75 : vector<1x8xf32>
    %cst_28 = arith.constant 0.000000e+00 : f32
    %77 = vector.broadcast %cst_28 : f32 to vector<1x8xf32>
    %78 = arith.maximumf %76, %77 : vector<1x8xf32>
    %79 = vector.broadcast %69 : vector<1x8xf32> to vector<8x8xf32>
    %80 = arith.subf %65, %79 : vector<8x8xf32>
    %cst_29 = arith.constant 9.99999974E-6 : f32
    %81 = vector.broadcast %cst_29 : f32 to vector<1x8xf32>
    %82 = arith.addf %78, %81 : vector<1x8xf32>
    %83 = math.rsqrt %82 : vector<1x8xf32>
    %84 = vector.broadcast %83 : vector<1x8xf32> to vector<8x8xf32>
    %85 = arith.mulf %80, %84 : vector<8x8xf32>
    %86 = vector.broadcast %9 : vector<1x8xf32> to vector<8x8xf32>
    %87 = arith.mulf %85, %86 : vector<8x8xf32>
    %88 = vector.broadcast %10 : vector<1x8xf32> to vector<8x8xf32>
    %89 = arith.addf %87, %88 : vector<8x8xf32>
    %c256 = arith.constant 256 : index
    %c0_30 = arith.constant 0 : index
    %90 = vector.load %arg1[%c256, %c0_30] : memref<264x128xf32, #tpu.memory_space<vmem>>, vector<8x4xf32>
    %cst_31 = arith.constant dense<0.000000e+00> : vector<8x4xf32>
    %91 = tpu.matmul %89, %90, %cst_31 {dimension_numbers = #tpu.dot_dimension_numbers<[1], [0], [0], [1], [0, 0, 1, 1], [], []>} : vector<8x8xf32>, vector<8x4xf32>, vector<8x4xf32> -> vector<8x4xf32>
    %92 = vector.broadcast %11 : vector<1x4xf32> to vector<8x4xf32>
    %93 = arith.addf %91, %92 : vector<8x4xf32>
    %cst_32 = arith.constant 2.000000e+00 : f32
    %94 = vector.broadcast %cst_32 : f32 to vector<8x4xf32>
    %95 = arith.mulf %94, %93 : vector<8x4xf32>
    %cst_33 = arith.constant 2.000000e+01 : f32
    %96 = vector.broadcast %cst_33 : f32 to vector<8x4xf32>
    %97 = arith.minimumf %95, %96 : vector<8x4xf32>
    %98 = math.exp %97 : vector<8x4xf32>
    %99 = math.log1p %98 : vector<8x4xf32>
    %cst_34 = arith.constant 2.000000e+00 : f32
    %100 = vector.broadcast %cst_34 : f32 to vector<8x4xf32>
    %101 = arith.divf %99, %100 : vector<8x4xf32>
    %cst_35 = arith.constant 2.000000e+01 : f32
    %102 = vector.broadcast %cst_35 : f32 to vector<8x4xf32>
    %103 = arith.cmpf ogt, %95, %102 : vector<8x4xf32>
    %104 = arith.select %103, %93, %101 : vector<8x4xi1>, vector<8x4xf32>
    %c0_36 = arith.constant 0 : index
    %c0_37 = arith.constant 0 : index
    %105 = vector.load %arg3[%c0_36, %c0_37] : memref<8x4xf32, #tpu.memory_space<vmem>>, vector<8x4xf32>
    tpu.vector_store %arg3[%c0_36, %c0_37], %104 {strides = array<i32>} : memref<8x4xf32, #tpu.memory_space<vmem>>, vector<8x4xf32>,
    return
  }
}

</mosaic_0001>

<llo_original>
// kernel: tpu_custom_call.1
$region0: #{tpu_custom_call.1}
  #allocation0 [shape = 'u32[]', space=smem, size = 0x4, offset = 0x4, fixed_abs, tag = 'smem constant byte address 0x4 - core index']
  #allocation1 [shape = 'u32[72,128]{1,0:T(1,128)}', space=vmem, size = 0x9000, scoped, tag = 'internal scratch']
  %s0 = inlined_call_operand.hbm [shape: f32[8,16], index: 0, kind: input, shape index: {}]
  %s1 = inlined_call_operand.hbm [shape: f32[264,128], index: 1, kind: input, shape index: {}]
  %s2 = inlined_call_operand.hbm [shape: f32[10,128], index: 2, kind: input, shape index: {}]
  %s3 = inlined_call_operand.vmem [shape: f32[8,4], index: 3, kind: output, shape index: {}]
  %s4 = sld [smem:[#allocation0]]
  $region34: #{tpu_custom_call.1} parent=0
    _
  %s6 = ssub.s32 1, %s4
  %s7 = scalar_select 0, %s6, %s4
  $region1: #{tpu_custom_call.1} parent=0
    #allocation2 [shape = 'u8[4096]{0}', space=vmem, size = 0x1000, scoped, tag = 'input window, operand 0, single buffered']
    #allocation3 [shape = 's32[1]{0}', space=sflag, size = 0x4, scoped, tag = 'scoped memory for tpu_custom_call.1']
    #allocation4 [shape = 'u8[135168]{0}', space=vmem, size = 0x21000, scoped, tag = 'input window, operand 1, single buffered']
    #allocation5 [shape = 's32[1]{0}', space=sflag, size = 0x4, scoped, tag = 'scoped memory for tpu_custom_call.1']
    #allocation6 [shape = 'u8[8192]{0}', space=vmem, size = 0x2000, scoped, tag = 'input window, operand 2, single buffered']
    %8 = vsyncpa [#allocation3], 0
    %9 = vsyncpa [#allocation5], 0
    // Predicated region
    $region2: #{tpu_custom_call.1} parent=1 // pred_check
      _
    $region3: #{tpu_custom_call.1} parent=1 // pred_check_branch
      %11 = sbr.rel (0) target = $region5
    $region4: #{tpu_custom_call.1} parent=1 // pred_region
      %13 = vsyncadd [#allocation3], 0
      %s15 = sshll.u32 %s0, 4
      %s16 = int_to_ptr.hbm [resolvable:$true] %s15
      %s17 = sshll.u32 [#allocation2], 4
      %s18 = int_to_ptr.vmem [resolvable:$true] %s17
      %20 = dma.hbm_to_vmem [thread:$0]  %s16, 128, %s18, [#allocation3]
    $region5: #{tpu_custom_call.1} parent=1 // pred_fallthru
      _
    // Predicated region
    $region6: #{tpu_custom_call.1} parent=1 // pred_check
      _
    $region7: #{tpu_custom_call.1} parent=1 // pred_check_branch
      %22 = sbr.rel (0) target = $region9
    $region8: #{tpu_custom_call.1} parent=1 // pred_region
      %24 = vsyncadd [#allocation5], 0
      %s25 = sshll.u32 %s1, 4
      %s26 = int_to_ptr.hbm [resolvable:$true] %s25
      %s27 = sshll.u32 [#allocation4], 4
      %s28 = int_to_ptr.vmem [resolvable:$true] %s27
      %33 = dma.hbm_to_vmem [thread:$0]  %s26, 4224, %s28, [#allocation5], 128, 128, 8
    $region9: #{tpu_custom_call.1} parent=1 // pred_fallthru
      _
    // Predicated region
    $region10: #{tpu_custom_call.1} parent=1 // pred_check
      _
    $region11: #{tpu_custom_call.1} parent=1 // pred_check_branch
      %35 = sbr.rel (0) target = $region13
    $region12: #{tpu_custom_call.1} parent=1 // pred_region
      %37 = vsyncadd [#allocation5], 0
      %s38 = sshll.u32 %s2, 4
      %s39 = int_to_ptr.hbm [resolvable:$true] %s38
      %s40 = sshll.u32 [#allocation6], 4
      %s41 = int_to_ptr.vmem [resolvable:$true] %s40
      %46 = dma.hbm_to_vmem [thread:$0]  %s39, 256, %s41, [#allocation5], 128, 128, 8
    $region13: #{tpu_custom_call.1} parent=1 // pred_fallthru
      _
    // Predicated region
    $region14: #{tpu_custom_call.1} parent=1 // pred_check
      _
    $region15: #{tpu_custom_call.1} parent=1 // pred_check_branch
      %48 = sbr.rel (0) target = $region17
    $region16: #{tpu_custom_call.1} parent=1 // pred_region
      %50 = dma.done [#allocation3], 128
    $region17: #{tpu_custom_call.1} parent=1 // pred_fallthru
      _
    // Predicated region
    $region18: #{tpu_custom_call.1} parent=1 // pred_check
      _
    $region19: #{tpu_custom_call.1} parent=1 // pred_check_branch
      %52 = sbr.rel (0) target = $region21
    $region20: #{tpu_custom_call.1} parent=1 // pred_region
      %54 = dma.done [#allocation5], 4224
    $region21: #{tpu_custom_call.1} parent=1 // pred_fallthru
      _
    // Predicated region
    $region22: #{tpu_custom_call.1} parent=1 // pred_check
      _
    $region23: #{tpu_custom_call.1} parent=1 // pred_check_branch
      %56 = sbr.rel (0) target = $region25
    $region24: #{tpu_custom_call.1} parent=1 // pred_region
      %58 = dma.done [#allocation5], 256
    $region25: #{tpu_custom_call.1} parent=1 // pred_fallthru
      _
    %v59 = vld [vmem:[#allocation2] sm:$0xff]
    %v60 = vld [vmem:[#allocation6] sm:$0xff]
    %v61 = vld [vmem:[#allocation6 + $0x8] sm:$0x3]
    %v62 = vld [vmem:[#allocation4] sm:$0xff]
    %v63 = vld [vmem:[#allocation4 + $0x8] sm:$0xff]
    %v64 = vperm.slane %v60, 0
    %vm65 = vcmask 130048
    %v67 = vsel %vm65, %v59, 0
    %69 = vmatpush.msra.mxu0 0.0
    %70 = vmatpush.msra.mxu0 0.0
    %71 = vmatpush.msra.mxu0 0.0
    %72 = vmatpush.msra.mxu0 0.0
    %73 = vmatpush.msra.mxu0 0.0
    %74 = vmatpush.msra.mxu0 0.0
    %75 = vmatpush.msra.mxu0 0.0
    %76 = vmatpush.msra.mxu0 0.0
    %77 = vmatpush.msra.mxu0 0.0
    %78 = vmatpush.msra.mxu0 0.0
    %79 = vmatpush.msra.mxu0 0.0
    %80 = vmatpush.msra.mxu0 0.0
    %81 = vmatpush.msra.mxu0 0.0
    %82 = vmatpush.msra.mxu0 0.0
    %83 = vmatpush.msra.mxu0 %v63
    %84 = vmatpush.msra.mxu0 %v62
    %85 = vmatmul.f32.gmra.mxu0 %v67
    %v86 = vpop.f32.mrf.mxu0
    %v87 = vadd.f32 %v64, %v86
    %88 = vdwg.mxu0
    %v89 = vmax.f32 %v87, 0.0
    %v90 = vld [vmem:[#allocation4 + $0x10] sm:$0xff]
    %v91 = vld [vmem:[#allocation4 + $0x18] sm:$0xff]
    %v92 = vld [vmem:[#allocation4 + $0x20] sm:$0xff]
    %v93 = vld [vmem:[#allocation4 + $0x28] sm:$0xff]
    %v94 = vld [vmem:[#allocation4 + $0x30] sm:$0xff]
    %v95 = vld [vmem:[#allocation4 + $0x38] sm:$0xff]
    %v96 = vld [vmem:[#allocation4 + $0x40] sm:$0xff]
    %v97 = vld [vmem:[#allocation4 + $0x48] sm:$0xff]
    %v98 = vld [vmem:[#allocation4 + $0x50] sm:$0xff]
    %v99 = vld [vmem:[#allocation4 + $0x58] sm:$0xff]
    %v100 = vld [vmem:[#allocation4 + $0x60] sm:$0xff]
    %v101 = vld [vmem:[#allocation4 + $0x68] sm:$0xff]
    %v102 = vld [vmem:[#allocation4 + $0x70] sm:$0xff]
    %v103 = vld [vmem:[#allocation4 + $0x78] sm:$0xff]
    %v104 = vld [vmem:[#allocation4 + $0x80] sm:$0xff]
    %v105 = vld [vmem:[#allocation4 + $0x88] sm:$0xff]
    %v106 = vperm.slane %v60, 1
    %107 = vmatpush.msra.mxu0 %v105
    %108 = vmatpush.msra.mxu0 %v104
    %109 = vmatpush.msra.mxu0 %v103
    %110 = vmatpush.msra.mxu0 %v102
    %111 = vmatpush.msra.mxu0 %v101
    %112 = vmatpush.msra.mxu0 %v100
    %113 = vmatpush.msra.mxu0 %v99
    %114 = vmatpush.msra.mxu0 %v98
    %115 = vmatpush.msra.mxu0 %v97
    %116 = vmatpush.msra.mxu0 %v96
    %117 = vmatpush.msra.mxu0 %v95
    %118 = vmatpush.msra.mxu0 %v94
    %119 = vmatpush.msra.mxu0 %v93
    %120 = vmatpush.msra.mxu0 %v92
    %121 = vmatpush.msra.mxu0 %v91
    %122 = vmatpush.msra.mxu0 %v90
    %123 = vmatmul.f32.gmra.mxu0 %v89
    %v124 = vpop.f32.mrf.mxu0
    %v125 = vadd.f32 %v106, %v124
    %126 = vdwg.mxu0
    %v127 = vmax.f32 %v125, 0.0
    %v128 = vld [vmem:[#allocation4 + $0x90] sm:$0xff]
    %v129 = vld [vmem:[#allocation4 + $0x98] sm:$0xff]
    %v130 = vld [vmem:[#allocation4 + $0xa0] sm:$0xff]
    %v131 = vld [vmem:[#allocation4 + $0xa8] sm:$0xff]
    %v132 = vld [vmem:[#allocation4 + $0xb0] sm:$0xff]
    %v133 = vld [vmem:[#allocation4 + $0xb8] sm:$0xff]
    %v134 = vld [vmem:[#allocation4 + $0xc0] sm:$0xff]
    %v135 = vld [vmem:[#allocation4 + $0xc8] sm:$0xff]
    %v136 = vperm.slane %v60, 2
    %vm137 = vcmask 523264
    %v139 = vsel %vm137, %v127, 0
    %141 = vmatpush.msra.mxu0 0.0
    %142 = vmatpush.msra.mxu0 0.0
    %143 = vmatpush.msra.mxu0 0.0
    %144 = vmatpush.msra.mxu0 0.0
    %145 = vmatpush.msra.mxu0 0.0
    %146 = vmatpush.msra.mxu0 0.0
    %147 = vmatpush.msra.mxu0 0.0
    %148 = vmatpush.msra.mxu0 0.0
    %149 = vmatpush.msra.mxu0 %v135
    %150 = vmatpush.msra.mxu0 %v134
    %151 = vmatpush.msra.mxu0 %v133
    %152 = vmatpush.msra.mxu0 %v132
    %153 = vmatpush.msra.mxu0 %v131
    %154 = vmatpush.msra.mxu0 %v130
    %155 = vmatpush.msra.mxu0 %v129
    %156 = vmatpush.msra.mxu0 %v128
    %157 = vmatmul.f32.gmra.mxu0 %v139
    %v158 = vpop.f32.mrf.mxu0
    %v159 = vadd.f32 %v136, %v158
    %160 = vdwg.mxu0
    %v161 = vmax.f32 %v159, 0.0
    %vm162 = vcmask 261120
    %v163 = vsel %vm162, %v161, 0.0
    %v164 = vrot.slane %v163, 4
    %v165 = vadd.f32 %v163, %v164
    %v166 = vrot.slane %v165, 2
    %v167 = vadd.f32 %v165, %v166
    %v168 = vrot.slane %v167, 1
    %v169 = vadd.f32 %v167, %v168
    %v170 = vrcp.pop 8.0
    %v171 = vmul.f32 8.0, %v170
    %v172 = vsub.f32 1.0, %v171
    %v173 = vmul.f32 %v170, %v172
    %v174 = vadd.f32 %v170, %v173
    %vm175 = vweird.f32 %v170
    %v176 = vsel %vm175, %v170, %v174
    %v177 = vmul.f32 %v169, %v176
    %v178 = vmul.f32 %v161, %v161
    %v179 = vsel %vm162, %v178, 0.0
    %v180 = vrot.slane %v179, 4
    %v181 = vadd.f32 %v179, %v180
    %v182 = vrot.slane %v181, 2
    %v183 = vadd.f32 %v181, %v182
    %v184 = vrot.slane %v183, 1
    %v185 = vadd.f32 %v183, %v184
    %v186 = vmul.f32 %v185, %v176
    %v187 = vmul.f32 %v177, %v177
    %v188 = vsub.f32 %v186, %v187
    %v189 = vmax.f32 %v188, 0.0
    %v190 = vsub.f32 %v161, %v177
    %v191 = vadd.f32 %v189, 1e-05
    %v192 = vrsqrt.pop %v191
    %v193 = vmul.f32 %v192, %v191
    %v194 = vmul.f32 %v193, %v192
    %v195 = vmul.f32 0.5, %v194
    %v196 = vsub.f32 1.5, %v195
    %v197 = vmul.f32 %v192, %v196
    %vm198 = vweird.f32 %v191
    %vm199 = vweird.f32 %v192
    %vm200 = vmor %vm198, %vm199
    %v201 = vsel %vm200, %v192, %v197
    %v202 = vmul.f32 %v190, %v201
    %v203 = vperm.slane %v60, 3
    %v204 = vmul.f32 %v202, %v203
    %v205 = vperm.slane %v60, 4
    %v206 = vadd.f32 %v204, %v205
    %v207 = vld [vmem:[#allocation4 + $0xd0] sm:$0xff]
    %v208 = vld [vmem:[#allocation4 + $0xd8] sm:$0xff]
    %v209 = vld [vmem:[#allocation4 + $0xe0] sm:$0xff]
    %v210 = vld [vmem:[#allocation4 + $0xe8] sm:$0xff]
    %v211 = vperm.slane %v60, 5
    %v213 = vsel %vm162, %v206, 0
    %215 = vmatpush.msra.mxu0 0.0
    %216 = vmatpush.msra.mxu0 0.0
    %217 = vmatpush.msra.mxu0 0.0
    %218 = vmatpush.msra.mxu0 0.0
    %219 = vmatpush.msra.mxu0 0.0
    %220 = vmatpush.msra.mxu0 0.0
    %221 = vmatpush.msra.mxu0 0.0
    %222 = vmatpush.msra.mxu0 0.0
    %223 = vmatpush.msra.mxu0 0.0
    %224 = vmatpush.msra.mxu0 0.0
    %225 = vmatpush.msra.mxu0 0.0
    %226 = vmatpush.msra.mxu0 0.0
    %227 = vmatpush.msra.mxu0 %v210
    %228 = vmatpush.msra.mxu0 %v209
    %229 = vmatpush.msra.mxu0 %v208
    %230 = vmatpush.msra.mxu0 %v207
    %231 = vmatmul.f32.gmra.mxu0 %v213
    %v232 = vpop.f32.mrf.mxu0
    %v233 = vadd.f32 %v211, %v232
    %234 = vdwg.mxu0
    %v235 = vmax.f32 %v233, 0.0
    %v236 = vld [vmem:[#allocation4 + $0xf0] sm:$0xff]
    %v237 = vld [vmem:[#allocation4 + $0xf8] sm:$0xff]
    %v238 = vperm.slane %v60, 6
    %v240 = vsel %vm65, %v235, 0
    %242 = vmatpush.msra.mxu0 0.0
    %243 = vmatpush.msra.mxu0 0.0
    %244 = vmatpush.msra.mxu0 0.0
    %245 = vmatpush.msra.mxu0 0.0
    %246 = vmatpush.msra.mxu0 0.0
    %247 = vmatpush.msra.mxu0 0.0
    %248 = vmatpush.msra.mxu0 0.0
    %249 = vmatpush.msra.mxu0 0.0
    %250 = vmatpush.msra.mxu0 0.0
    %251 = vmatpush.msra.mxu0 0.0
    %252 = vmatpush.msra.mxu0 0.0
    %253 = vmatpush.msra.mxu0 0.0
    %254 = vmatpush.msra.mxu0 0.0
    %255 = vmatpush.msra.mxu0 0.0
    %256 = vmatpush.msra.mxu0 %v237
    %257 = vmatpush.msra.mxu0 %v236
    %258 = vmatmul.f32.gmra.mxu0 %v240
    %v259 = vpop.f32.mrf.mxu0
    %v260 = vadd.f32 %v238, %v259
    %261 = vdwg.mxu0
    %v262 = vmax.f32 %v260, 0.0
    %vm263 = vcmask 64512
    %v264 = vsel %vm263, %v262, 0.0
    %v265 = vrot.slane %v264, 4
    %v266 = vadd.f32 %v264, %v265
    %v267 = vrot.slane %v266, 2
    %v268 = vadd.f32 %v266, %v267
    %v269 = vrot.slane %v268, 1
    %v270 = vadd.f32 %v268, %v269
    %v271 = vmul.f32 %v270, %v176
    %v272 = vmul.f32 %v262, %v262
    %v273 = vsel %vm263, %v272, 0.0
    %v274 = vrot.slane %v273, 4
    %v275 = vadd.f32 %v273, %v274
    %v276 = vrot.slane %v275, 2
    %v277 = vadd.f32 %v275, %v276
    %v278 = vrot.slane %v277, 1
    %v279 = vadd.f32 %v277, %v278
    %v280 = vmul.f32 %v279, %v176
    %v281 = vmul.f32 %v271, %v271
    %v282 = vsub.f32 %v280, %v281
    %v283 = vmax.f32 %v282, 0.0
    %v284 = vsub.f32 %v262, %v271
    %v285 = vadd.f32 %v283, 1e-05
    %v286 = vrsqrt.pop %v285
    %v287 = vmul.f32 %v286, %v285
    %v288 = vmul.f32 %v287, %v286
    %v289 = vmul.f32 0.5, %v288
    %v290 = vsub.f32 1.5, %v289
    %v291 = vmul.f32 %v286, %v290
    %vm292 = vweird.f32 %v285
    %vm293 = vweird.f32 %v286
    %vm294 = vmor %vm292, %vm293
    %v295 = vsel %vm294, %v286, %v291
    %v296 = vmul.f32 %v284, %v295
    %v297 = vperm.slane %v60, 7
    %v298 = vmul.f32 %v296, %v297
    %v299 = vperm.slane %v61, 0
    %v300 = vadd.f32 %v298, %v299
    %v301 = vld [vmem:[#allocation4 + $0x100] sm:$0xff]
    %v302 = vperm.slane %v61, 1
    %v304 = vsel %vm263, %v300, 0
    %306 = vmatpush.msra.mxu0 0.0
    %307 = vmatpush.msra.mxu0 0.0
    %308 = vmatpush.msra.mxu0 0.0
    %309 = vmatpush.msra.mxu0 0.0
    %310 = vmatpush.msra.mxu0 0.0
    %311 = vmatpush.msra.mxu0 0.0
    %312 = vmatpush.msra.mxu0 0.0
    %313 = vmatpush.msra.mxu0 0.0
    %314 = vmatpush.msra.mxu0 0.0
    %315 = vmatpush.msra.mxu0 0.0
    %316 = vmatpush.msra.mxu0 0.0
    %317 = vmatpush.msra.mxu0 0.0
    %318 = vmatpush.msra.mxu0 0.0
    %319 = vmatpush.msra.mxu0 0.0
    %320 = vmatpush.msra.mxu0 0.0
    %321 = vmatpush.msra.mxu0 %v301
    %322 = vmatmul.f32.gmra.mxu0 %v304
    %v323 = vpop.f32.mrf.mxu0
    %v324 = vadd.f32 %v302, %v323
    %325 = vdwg.mxu0
    %v326 = vmul.f32 %v324, 2.0
    %v327 = vmin.f32 %v326, 20.0
    %v328 = vmul.f32 %v327, 1.442695
    %v329 = vpow.pop %v328
    %v330 = vadd.f32 %v329, 1.0
    %v331 = vlog2.pop %v330
    %v332 = vmul.f32 %v331, 0.6931472
    %v333 = vmul.f32 -0.5, %v329
    %v334 = vadd.f32 %v333, 1.0
    %v335 = vmul.f32 %v334, %v329
    %v336 = vand.u32 2147483647, %v329
    %vm337 = vcmp.lt.f32.partialorder %v336, 0.0004427343
    %v338 = vsel %vm337, %v335, %v332
    %v339 = vrcp.pop 2.0
    %v340 = vmul.f32 2.0, %v339
    %v341 = vsub.f32 1.0, %v340
    %v342 = vmul.f32 %v339, %v341
    %v343 = vadd.f32 %v339, %v342
    %vm344 = vweird.f32 %v339
    %v345 = vsel %vm344, %v339, %v343
    %v346 = vmul.f32 %v338, %v345
    %vm347 = vcmp.gt.f32.partialorder %v326, 20.0
    %v348 = vsel %vm347, %v324, %v346
    %vm349 = vcmask 31744
    %350 = vst.msk [vmem:[%s3] sm:$0xff] %vm349, %v348
    // Predicated region
    $region26: #{tpu_custom_call.1} parent=1 // pred_check
      _
    $region27: #{tpu_custom_call.1} parent=1 // pred_check_branch
      %352 = sbr.rel (0) target = $region29
    $region28: #{tpu_custom_call.1} parent=1 // pred_region
      _
    $region29: #{tpu_custom_call.1} parent=1 // pred_fallthru
      _
    // Predicated region
    $region30: #{tpu_custom_call.1} parent=1 // pred_check
      _
    $region31: #{tpu_custom_call.1} parent=1 // pred_check_branch
      %354 = sbr.rel (0) target = $region33
    $region32: #{tpu_custom_call.1} parent=1 // pred_region
      _
    $region33: #{tpu_custom_call.1} parent=1 // pred_fallthru
      _
    %355 = vsyncpa [#allocation3], 1
    %356 = vsyncpa [#allocation5], 1

</llo_original>
